<compile_context>
chip_gen: v6e
topology: v6e:2x2x1
jax: 0.10.0
libtpu: 0.0.40
codegen_flags: <defaults>
</compile_context>

<pallas_src>
import functools

import jax
import jax.numpy as jnp
from jax import lax
from jax.experimental import pallas as pl
from jax.experimental.pallas import tpu as pltpu


def _round_up(a, b):
    return (a + b - 1) // b * b


def _logreg_bce_kernel(scal_ref, x_ref, w_ref, y_ref, out_ref, f_buf,
                       *, n_valid, tn):
    # scal_ref: SMEM (2,)          f32    -- [bias, pos_weight]
    # x_ref:    VMEM (TN, F)       native -- feature tile, rows [i*TN, i*TN+TN)
    # w_ref:    VMEM (1, F)        native -- regression weights beta[:F]
    # y_ref:    VMEM (8, TN/8)     f32    -- labels, dense layout
    # out_ref:  VMEM (8, 128)      f32    -- per-tile partial loss sums
    # f_buf:    VMEM (8, TN/8)     f32    -- scratch for the dense logit tile
    i = pl.program_id(0)
    bias = scal_ref[0]
    pw = scal_ref[1]
    cols = tn // 8                       # multiple of 128

    # Lane-dense logits on the MXU: (1,F) x (TN,F) contracted over F -> (1,TN),
    # f32 accumulation.  Mosaic feeds the NT form directly (no transposed copy
    # of the multi-MiB x tile is materialized).
    f_row = lax.dot_general(
        w_ref[...], x_ref[...],
        dimension_numbers=(((1,), (1,)), ((), ())),
        preferred_element_type=jnp.float32,
    ) + bias                             # (1, TN) f32

    # Repack the sublane-sparse (1, TN) row into a dense (8, TN/8) tile:
    # eight 128-aligned lane slices stored to successive sublanes of a VMEM
    # scratch (cheap strided vst's).  All following VPU/EUP math then runs on
    # fully-packed vregs (8x fewer instructions than on (1, TN)).
    for s in range(8):
        f_buf[pl.ds(s, 1), :] = f_row[:, s * cols:(s + 1) * cols]
    f = f_buf[...]                       # (8, TN/8) dense f32
    y = y_ref[...]                       # (8, TN/8) dense f32  (same row mapping)

    # Numerically stable BCEWithLogitsLoss with pos_weight (PyTorch formula):
    #   loss = (1 - y) * f + (1 + (pw - 1) * y) * (log1p(exp(-|f|)) + max(-f, 0))
    log_weight = 1.0 + (pw - 1.0) * y
    softplus_neg = jnp.log1p(jnp.exp(-jnp.abs(f))) + jnp.maximum(-f, 0.0)
    loss = (1.0 - y) * f + log_weight * softplus_neg          # (8, TN/8)

    def _partial(v):
        # (8, TN/8) -> (8, 128): whole-vreg, 128-aligned VALU adds (no relayout).
        acc = v[:, 0:128]
        for j in range(1, cols // 128):
            acc = acc + v[:, j * 128:(j + 1) * 128]
        return acc

    if n_valid % tn == 0:
        # No tail anywhere: never pay for the mask.
        out_ref[...] = _partial(loss)
    else:
        last = pl.num_programs(0) - 1

        @pl.when(i != last)
        def _():
            out_ref[...] = _partial(loss)

        @pl.when(i == last)
        def _():
            # Dense-layout element (s, l) corresponds to row i*TN + s*(TN/8) + l.
            sub = lax.broadcasted_iota(jnp.int32, loss.shape, 0)
            lane = lax.broadcasted_iota(jnp.int32, loss.shape, 1)
            row = i * tn + sub * cols + lane
            # Select (NOT multiply-by-mask): discards garbage/NaN from the
            # undefined tail region of the boundary x/y blocks.
            out_ref[...] = _partial(jnp.where(row < n_valid, loss, 0.0))


def logreg_weights_loss(x, y, beta, weight, *,
                        target_tile_bytes=4 << 20,
                        max_tile_bytes=16 << 20):
    """Equivalent of LogReg_weights(nfeat, weight).forward(x, y) with params `beta`."""
    n, nfeat = x.shape
    assert beta.shape == (nfeat + 1,)

    if not jnp.issubdtype(x.dtype, jnp.floating):
        x = x.astype(jnp.float32)
    itemsize = jnp.dtype(x.dtype).itemsize

    # ---- byte-targeted, VMEM-aware tile choice ------------------------------
    # Aim for ~target_tile_bytes of x per grid step (amortises the ~0.35us/step
    # overhead against the HBM-bound x stream); cap at max_tile_bytes so the
    # double-buffered x tile fits v7x's 64 MiB VMEM with headroom.  Rows are a
    # multiple of 1024 so the dense (8, TN/8) in-kernel layout works out.
    bytes_per_row = max(1, itemsize * nfeat)
    rows_target = max(1, target_tile_bytes // bytes_per_row)
    rows_cap = max(1, max_tile_bytes // bytes_per_row)
    rows = max(1024, min(rows_target, rows_cap))
    tn = min(_round_up(rows, 1024), _round_up(n, 1024))
    # TODO(synk): for very large nfeat (>~4 K f32 features) even 1024 rows blows
    # the v7x VMEM budget; that regime would also need feature-dim tiling.
    grid = (n + tn - 1) // tn
    cols = tn // 8

    # ---- operands ------------------------------------------------------------
    # x is streamed as-is, in its native dtype.  Weights are cast to x's dtype
    # (MXU-native pairing); accumulation is f32 via preferred_element_type.
    w_row = beta[:nfeat].astype(x.dtype).reshape(1, nfeat)        # (1, F)
    scal = jnp.stack([beta[nfeat].astype(jnp.float32),            # bias
                      jnp.asarray(weight, dtype=jnp.float32)])    # scalar pos_weight

    # Labels, padded to grid*TN (cheap: N*4 bytes) and pre-laid-out densely so
    # the kernel's (8, TN/8) y block matches the dense logit layout:
    #   y_dense[i*8 + s, c] == y[i*TN + s*(TN/8) + c]
    y32 = y.astype(jnp.float32).reshape(n)
    pad = grid * tn - n
    if pad:
        y32 = jnp.concatenate([y32, jnp.zeros((pad,), jnp.float32)])
    y_dense = y32.reshape(grid * 8, cols)

    kernel = functools.partial(_logreg_bce_kernel, n_valid=n, tn=tn)

    x_tile_bytes = tn * nfeat * itemsize
    vmem_need = (2 * x_tile_bytes           # double-buffered x stream
                 + 2 * tn * 4               # double-buffered y tiles
                 + tn * 4                   # dense logit scratch
                 + 2 * 8 * 128 * 4          # output partials
                 + 2 * nfeat * itemsize     # weight row
                 + (2 << 20))               # slack
    vmem_limit = int(max(vmem_need, 32 << 20))

    cost = pl.CostEstimate(
        flops=int(2 * n * nfeat + 12 * n),
        transcendentals=int(2 * n),
        bytes_accessed=int(n * nfeat * itemsize + grid * tn * 4
                           + grid * 8 * 128 * 4 + nfeat * itemsize),
    )

    partials = pl.pallas_call(
        kernel,
        out_shape=jax.ShapeDtypeStruct((8, grid * 128), jnp.float32),
        grid=(grid,),
        in_specs=[
            pl.BlockSpec(memory_space=pltpu.MemorySpace.SMEM),   # [bias, pos_weight]
            pl.BlockSpec((tn, nfeat), lambda i: (i, 0)),         # x tile (native dtype)
            pl.BlockSpec((1, nfeat), lambda i: (0, 0)),          # weight row
            pl.BlockSpec((8, cols), lambda i: (i, 0)),           # dense label tile
        ],
        out_specs=pl.BlockSpec((8, 128), lambda i: (0, i)),      # per-tile partials
        scratch_shapes=[pltpu.VMEM((8, cols), jnp.float32)],     # dense logit tile
        compiler_params=pltpu.CompilerParams(
            dimension_semantics=("parallel",),
            vmem_limit_bytes=vmem_limit),
        cost_estimate=cost,
    )(scal, x, w_row, y_dense)

    # Tiny final reduction over grid*8*128 partials; divide by the TRUE N.
    return jnp.sum(partials) / jnp.float32(n)


def _reference_loss(x, y, beta, weight):
    """Pure-JAX reference of BCEWithLogitsLoss(pos_weight=weight) on x_aug @ beta."""
    n = x.shape[0]
    x_aug = jnp.concatenate(
        [x.astype(jnp.float32), jnp.ones((n, 1), dtype=jnp.float32)], axis=1
    )
    f = x_aug @ beta.astype(jnp.float32)
    y = y.astype(jnp.float32)
    log_weight = 1.0 + (weight - 1.0) * y
    loss = (1.0 - y) * f + log_weight * (
        jnp.log1p(jnp.exp(-jnp.abs(f))) + jnp.maximum(-f, 0.0))
    return jnp.mean(loss)


if __name__ == "__main__":
    key = jax.random.PRNGKey(0)
    kx, ky, kb = jax.random.split(key, 3)

    # Small shapes; N deliberately not a multiple of the tile so the multi-tile
    # grid + tail-masking path is exercised.
    N, NFEAT = 2600, 32
    WEIGHT = 3.0            # pos_weight scalar (module: weight * ones([10000]))

    x = jax.random.normal(kx, (N, NFEAT), dtype=jnp.float32)
    y = (jax.random.uniform(ky, (N,)) > 0.5).astype(jnp.float32)

    # Module __init__ uses zeros([nfeat+1]); use a small deterministic random
    # beta so the matmul path is exercised non-trivially.
    beta = 0.1 * jax.random.normal(kb, (NFEAT + 1,), dtype=jnp.float32)

    ref = jax.block_until_ready(_reference_loss(x, y, beta, WEIGHT))

    # (a) forced-small tile -> 3 grid steps, last one masked (tail path).
    loss_a = jax.block_until_ready(
        logreg_weights_loss(x, y, beta, WEIGHT, target_tile_bytes=1 << 17))
    # (b) default byte-targeted tile -> single (partial) block.
    loss_b = jax.block_until_ready(
        logreg_weights_loss(x, y, beta, WEIGHT))

    assert jnp.allclose(loss_a, ref, rtol=1e-5, atol=1e-5), (loss_a, ref)
    assert jnp.allclose(loss_b, ref, rtol=1e-5, atol=1e-5), (loss_b, ref)
    print("KERNEL_OK")
</pallas_src>

<mosaic_0001>
module attributes {stable_mosaic.version = 11 : i64} {
  func.func @_logreg_bce_kernel(%arg0: i32, %arg1: memref<2xf32, #tpu.memory_space<smem>>, %arg2: memref<1024x32xf32, #tpu.memory_space<vmem>>, %arg3: memref<1x32xf32, #tpu.memory_space<vmem>>, %arg4: memref<8x128xf32, #tpu.memory_space<vmem>>, %arg5: memref<8x128xf32, #tpu.memory_space<vmem>>, %arg6: memref<8x128xf32, #tpu.memory_space<vmem>>) attributes {dimension_semantics = [#tpu.dimension_semantics<parallel>], iteration_bounds = array<i64: 3>, scalar_prefetch = 0 : i64, scratch_operands = 1 : i64, tpu.core_type = #tpu.core_type<tc>, window_params = [{transform_indices = @transform_0, window_bounds = array<i64: 2>}, {transform_indices = @transform_1, window_bounds = array<i64: 1024, 32>}, {pipeline_mode = #tpu.pipeline_mode<synchronous>, transform_indices = @transform_2, window_bounds = array<i64: 1, 32>}, {transform_indices = @transform_3, window_bounds = array<i64: 8, 128>}, {transform_indices = @transform_4, window_bounds = array<i64: 8, 128>}]} {
    %c0 = arith.constant 0 : index
    %0 = memref.load %arg1[%c0] : memref<2xf32, #tpu.memory_space<smem>>
    %c1 = arith.constant 1 : index
    %1 = memref.load %arg1[%c1] : memref<2xf32, #tpu.memory_space<smem>>
    %c0_0 = arith.constant 0 : index
    %c0_1 = arith.constant 0 : index
    %2 = vector.load %arg3[%c0_0, %c0_1] : memref<1x32xf32, #tpu.memory_space<vmem>>, vector<1x32xf32>
    %c0_2 = arith.constant 0 : index
    %c0_3 = arith.constant 0 : index
    %3 = vector.load %arg2[%c0_2, %c0_3] : memref<1024x32xf32, #tpu.memory_space<vmem>>, vector<1024x32xf32>
    %cst = arith.constant dense<0.000000e+00> : vector<1x1024xf32>
    %4 = tpu.matmul %2, %3, %cst {dimension_numbers = #tpu.dot_dimension_numbers<[1], [1], [0], [0], [0, 0, 1, 0], [], []>} : vector<1x32xf32>, vector<1024x32xf32>, vector<1x1024xf32> -> vector<1x1024xf32>
    %5 = vector.broadcast %0 : f32 to vector<1x1024xf32>
    %6 = arith.addf %4, %5 : vector<1x1024xf32>
    %7 = vector.extract_strided_slice %6 {offsets = [0, 0], sizes = [1, 128], strides = [1, 1]} : vector<1x1024xf32> to vector<1x128xf32>
    %c0_4 = arith.constant 0 : index
    %c0_5 = arith.constant 0 : index
    %8 = vector.load %arg6[%c0_4, %c0_5] : memref<8x128xf32, #tpu.memory_space<vmem>>, vector<1x128xf32>
    tpu.vector_store %arg6[%c0_4, %c0_5], %7 {strides = array<i32>} : memref<8x128xf32, #tpu.memory_space<vmem>>, vector<1x128xf32>,
    %9 = vector.extract_strided_slice %6 {offsets = [0, 128], sizes = [1, 128], strides = [1, 1]} : vector<1x1024xf32> to vector<1x128xf32>
    %c1_6 = arith.constant 1 : index
    %c0_7 = arith.constant 0 : index
    %10 = vector.load %arg6[%c1_6, %c0_7] : memref<8x128xf32, #tpu.memory_space<vmem>>, vector<1x128xf32>
    tpu.vector_store %arg6[%c1_6, %c0_7], %9 {strides = array<i32>} : memref<8x128xf32, #tpu.memory_space<vmem>>, vector<1x128xf32>,
    %11 = vector.extract_strided_slice %6 {offsets = [0, 256], sizes = [1, 128], strides = [1, 1]} : vector<1x1024xf32> to vector<1x128xf32>
    %c2 = arith.constant 2 : index
    %c0_8 = arith.constant 0 : index
    %12 = vector.load %arg6[%c2, %c0_8] : memref<8x128xf32, #tpu.memory_space<vmem>>, vector<1x128xf32>
    tpu.vector_store %arg6[%c2, %c0_8], %11 {strides = array<i32>} : memref<8x128xf32, #tpu.memory_space<vmem>>, vector<1x128xf32>,
    %13 = vector.extract_strided_slice %6 {offsets = [0, 384], sizes = [1, 128], strides = [1, 1]} : vector<1x1024xf32> to vector<1x128xf32>
    %c3 = arith.constant 3 : index
    %c0_9 = arith.constant 0 : index
    %14 = vector.load %arg6[%c3, %c0_9] : memref<8x128xf32, #tpu.memory_space<vmem>>, vector<1x128xf32>
    tpu.vector_store %arg6[%c3, %c0_9], %13 {strides = array<i32>} : memref<8x128xf32, #tpu.memory_space<vmem>>, vector<1x128xf32>,
    %15 = vector.extract_strided_slice %6 {offsets = [0, 512], sizes = [1, 128], strides = [1, 1]} : vector<1x1024xf32> to vector<1x128xf32>
    %c4 = arith.constant 4 : index
    %c0_10 = arith.constant 0 : index
    %16 = vector.load %arg6[%c4, %c0_10] : memref<8x128xf32, #tpu.memory_space<vmem>>, vector<1x128xf32>
    tpu.vector_store %arg6[%c4, %c0_10], %15 {strides = array<i32>} : memref<8x128xf32, #tpu.memory_space<vmem>>, vector<1x128xf32>,
    %17 = vector.extract_strided_slice %6 {offsets = [0, 640], sizes = [1, 128], strides = [1, 1]} : vector<1x1024xf32> to vector<1x128xf32>
    %c5 = arith.constant 5 : index
    %c0_11 = arith.constant 0 : index
    %18 = vector.load %arg6[%c5, %c0_11] : memref<8x128xf32, #tpu.memory_space<vmem>>, vector<1x128xf32>
    tpu.vector_store %arg6[%c5, %c0_11], %17 {strides = array<i32>} : memref<8x128xf32, #tpu.memory_space<vmem>>, vector<1x128xf32>,
    %19 = vector.extract_strided_slice %6 {offsets = [0, 768], sizes = [1, 128], strides = [1, 1]} : vector<1x1024xf32> to vector<1x128xf32>
    %c6 = arith.constant 6 : index
    %c0_12 = arith.constant 0 : index
    %20 = vector.load %arg6[%c6, %c0_12] : memref<8x128xf32, #tpu.memory_space<vmem>>, vector<1x128xf32>
    tpu.vector_store %arg6[%c6, %c0_12], %19 {strides = array<i32>} : memref<8x128xf32, #tpu.memory_space<vmem>>, vector<1x128xf32>,
    %21 = vector.extract_strided_slice %6 {offsets = [0, 896], sizes = [1, 128], strides = [1, 1]} : vector<1x1024xf32> to vector<1x128xf32>
    %c7 = arith.constant 7 : index
    %c0_13 = arith.constant 0 : index
    %22 = vector.load %arg6[%c7, %c0_13] : memref<8x128xf32, #tpu.memory_space<vmem>>, vector<1x128xf32>
    tpu.vector_store %arg6[%c7, %c0_13], %21 {strides = array<i32>} : memref<8x128xf32, #tpu.memory_space<vmem>>, vector<1x128xf32>,
    %c0_14 = arith.constant 0 : index
    %c0_15 = arith.constant 0 : index
    %23 = vector.load %arg6[%c0_14, %c0_15] : memref<8x128xf32, #tpu.memory_space<vmem>>, vector<8x128xf32>
    %c0_16 = arith.constant 0 : index
    %c0_17 = arith.constant 0 : index
    %24 = vector.load %arg4[%c0_16, %c0_17] : memref<8x128xf32, #tpu.memory_space<vmem>>, vector<8x128xf32>
    %cst_18 = arith.constant 1.000000e+00 : f32
    %25 = arith.subf %1, %cst_18 : f32
    %26 = vector.broadcast %25 : f32 to vector<8x128xf32>
    %27 = arith.mulf %26, %24 : vector<8x128xf32>
    %cst_19 = arith.constant 1.000000e+00 : f32
    %28 = vector.broadcast %cst_19 : f32 to vector<8x128xf32>
    %29 = arith.addf %28, %27 : vector<8x128xf32>
    %30 = math.absf %23 : vector<8x128xf32>
    %cst_20 = arith.constant 0.000000e+00 : f32
    %31 = vector.broadcast %cst_20 : f32 to vector<8x128xf32>
    %32 = arith.subf %31, %30 : vector<8x128xf32>
    %33 = math.exp %32 : vector<8x128xf32>
    %34 = math.log1p %33 : vector<8x128xf32>
    %cst_21 = arith.constant 0.000000e+00 : f32
    %35 = vector.broadcast %cst_21 : f32 to vector<8x128xf32>
    %36 = arith.subf %35, %23 : vector<8x128xf32>
    %cst_22 = arith.constant 0.000000e+00 : f32
    %37 = vector.broadcast %cst_22 : f32 to vector<8x128xf32>
    %38 = arith.maximumf %36, %37 : vector<8x128xf32>
    %39 = arith.addf %34, %38 : vector<8x128xf32>
    %cst_23 = arith.constant 1.000000e+00 : f32
    %40 = vector.broadcast %cst_23 : f32 to vector<8x128xf32>
    %41 = arith.subf %40, %24 : vector<8x128xf32>
    %42 = arith.mulf %41, %23 : vector<8x128xf32>
    %43 = arith.mulf %29, %39 : vector<8x128xf32>
    %44 = arith.addf %42, %43 : vector<8x128xf32>
    %c2_i32 = arith.constant 2 : i32
    %45 = arith.cmpi ne, %arg0, %c2_i32 : i32
    %46 = arith.extui %45 : i1 to i32
    %c0_i32 = arith.constant 0 : i32
    %47 = arith.cmpi ne, %46, %c0_i32 : i32
    scf.if %47 {
      %c0_26 = arith.constant 0 : index
      %c0_27 = arith.constant 0 : index
      %51 = vector.load %arg5[%c0_26, %c0_27] : memref<8x128xf32, #tpu.memory_space<vmem>>, vector<8x128xf32>
      tpu.vector_store %arg5[%c0_26, %c0_27], %44 {strides = array<i32>} : memref<8x128xf32, #tpu.memory_space<vmem>>, vector<8x128xf32>,
    } else {
    }
    %c2_i32_24 = arith.constant 2 : i32
    %48 = arith.cmpi eq, %arg0, %c2_i32_24 : i32
    %49 = arith.extui %48 : i1 to i32
    %c0_i32_25 = arith.constant 0 : i32
    %50 = arith.cmpi ne, %49, %c0_i32_25 : i32
    scf.if %50 {
      %51 = tpu.iota {dimensions = array<i32: 0>} : vector<8x128xi32>
      %52 = tpu.iota {dimensions = array<i32: 1>} : vector<8x128xi32>
      %c1024_i32 = arith.constant 1024 : i32
      %53 = arith.muli %arg0, %c1024_i32 : i32
      %c128_i32 = arith.constant 128 : i32
      %54 = vector.broadcast %c128_i32 : i32 to vector<8x128xi32>
      %55 = arith.muli %51, %54 : vector<8x128xi32>
      %56 = vector.broadcast %53 : i32 to vector<8x128xi32>
      %57 = arith.addi %56, %55 : vector<8x128xi32>
      %58 = arith.addi %57, %52 : vector<8x128xi32>
      %c2600_i32 = arith.constant 2600 : i32
      %59 = vector.broadcast %c2600_i32 : i32 to vector<8x128xi32>
      %60 = arith.cmpi slt, %58, %59 : vector<8x128xi32>
      %cst_26 = arith.constant 0.000000e+00 : f32
      %61 = vector.broadcast %cst_26 : f32 to vector<8x128xf32>
      %62 = arith.select %60, %44, %61 : vector<8x128xi1>, vector<8x128xf32>
      %c0_27 = arith.constant 0 : index
      %c0_28 = arith.constant 0 : index
      %63 = vector.load %arg5[%c0_27, %c0_28] : memref<8x128xf32, #tpu.memory_space<vmem>>, vector<8x128xf32>
      tpu.vector_store %arg5[%c0_27, %c0_28], %62 {strides = array<i32>} : memref<8x128xf32, #tpu.memory_space<vmem>>, vector<8x128xf32>,
    } else {
    }
    return
  }
  func.func @transform_0(%arg0: i32) -> i32 {
    %c0_i32 = arith.constant 0 : i32
    %c0_i32_0 = arith.constant 0 : i32
    return %c0_i32 : i32
  }
  func.func @transform_1(%arg0: i32) -> (i32, i32) {
    %c0_i32 = arith.constant 0 : i32
    %c0_i32_0 = arith.constant 0 : i32
    return %arg0, %c0_i32 : i32, i32
  }
  func.func @transform_2(%arg0: i32) -> (i32, i32) {
    %c0_i32 = arith.constant 0 : i32
    %c0_i32_0 = arith.constant 0 : i32
    %c0_i32_1 = arith.constant 0 : i32
    return %c0_i32, %c0_i32_0 : i32, i32
  }
  func.func @transform_3(%arg0: i32) -> (i32, i32) {
    %c0_i32 = arith.constant 0 : i32
    %c0_i32_0 = arith.constant 0 : i32
    return %arg0, %c0_i32 : i32, i32
  }
  func.func @transform_4(%arg0: i32) -> (i32, i32) {
    %c0_i32 = arith.constant 0 : i32
    %c0_i32_0 = arith.constant 0 : i32
    return %c0_i32, %arg0 : i32, i32
  }
}

</mosaic_0001>

<llo_original>
// kernel: tpu_custom_call.1
$region0: #{tpu_custom_call.1}
  #allocation0 [shape = 'u32[]', space=smem, size = 0x4, offset = 0x4, fixed_abs, tag = 'smem constant byte address 0x4 - core index']
  #allocation1 [shape = 'u32[144,128]{1,0:T(1,128)}', space=vmem, size = 0x12000, scoped, tag = 'internal scratch']
  #allocation2 [shape = 'f32[8,128]{1,0:T(8,128)}', space=vmem, size = 0x1000, scoped, tag = 'scratch operand']
  %s0 = inlined_call_operand.vmem [shape: f32[2], index: 0, kind: input, shape index: {}]
  %s1 = inlined_call_operand.vmem [shape: f32[2600,32], index: 1, kind: input, shape index: {}]
  %s2 = inlined_call_operand.vmem [shape: f32[1,32], index: 2, kind: input, shape index: {}]
  %s3 = inlined_call_operand.vmem [shape: f32[24,128], index: 3, kind: input, shape index: {}]
  %s4 = inlined_call_operand.hbm [shape: f32[8,384], index: 4, kind: output, shape index: {}]
  %s5 = sld [smem:[#allocation0]]
  $region61: #{tpu_custom_call.1} parent=0
    _
  %s7 = ssub.s32 1, %s5
  %s8 = scalar_select 0, %s7, %s5
  $region1: #{tpu_custom_call.1} parent=0
    #allocation3 [shape = 'u8[512]{0}', space=smem, size = 0x200, scoped, tag = 'input window, operand 0, single buffered']
    #allocation4 [shape = 's32[2]{0}', space=sflag, size = 0x8, scoped, tag = 'scoped memory for tpu_custom_call.1']
    #allocation5 [shape = 's32[2]{0}', space=sflag, size = 0x8, scoped, tag = 'scoped memory for tpu_custom_call.1']
    #allocation6 [shape = 'u8[8192]{0}', space=vmem, size = 0x2000, scoped, tag = 'output window, operand 0']
    %9 = vsyncpa [#allocation5], 0
    %10 = vsyncpa [#allocation4], 0
    %s11 = scalar_lea.sflag [#allocation4], 1
    %12 = vsyncpa %s11, 0
    loop: start=0, step=1, limit=5
    $region2: #{tpu_custom_call.1} parent=1 // loop_pre_header
      _
    $region3: #{tpu_custom_call.1} parent=1 // loop_header
      %s14 = sphi 0, %s18
      %p15 = scmp.ge.s32.totalorder %s14, 5
      %s22 = sphi 0, %s22
      %s24 = sphi 0, %s22
      %s25 = sphi 0, %s24
      %s39 = sphi 0, %s25
      %s45 = sphi 0, %s47
      %s48 = sphi 0, %s45
      %s49 = sphi 0, %s48
      %s65 = sphi 0, %s49
      %s69 = sphi 0, %s69
      %s71 = sphi 0, %s69
      %s72 = sphi 0, %s71
      %s86 = sphi 0, %s72
      %s92 = sphi 0, %s94
      %s95 = sphi 0, %s92
      %s96 = sphi 0, %s95
      %s112 = sphi 0, %s96
      %s118 = sphi 0, %s120
      %s121 = sphi 0, %s118
      %s122 = sphi 0, %s121
      %s138 = sphi 0, %s122
    $region4: #{tpu_custom_call.1} parent=1 // loop_header_branch
      %17 = sbr.rel (%p15) target = $region8
    $region5: #{tpu_custom_call.1} parent=1 // loop_body
      %s19 = ssub.s32 %s14, 1
      %s20 = ssub.s32 %s14, 2
      %s21 = sadd.s32 %s14, 1
      %s23 = sadd.s32 %s22, 1
      %p26 = scmp.eq.s32.totalorder %s14, 2
      %p27 = scmp.ne.s32.totalorder %s22, %s24
      %p28 = scmp.eq.s32.totalorder %s14, 0
      %p29 = por %p27, %p28
      %p30 = scmp.ne.s32.totalorder %s22, %s24
      %p31 = scmp.eq.s32.totalorder %s19, 2
      %p32 = por %p30, %p31
      %p33 = scmp.ne.s32.totalorder %s24, %s25
      %p34 = scmp.eq.s32.totalorder %s19, 0
      %p35 = por %p33, %p34
      %p36 = scmp.ne.s32.totalorder %s24, %s25
      %p37 = scmp.eq.s32.totalorder %s20, 2
      %p38 = por %p36, %p37
      %p40 = scmp.ne.s32.totalorder %s25, %s39
      %p41 = scmp.eq.s32.totalorder %s20, 0
      %p42 = por %p40, %p41
      %s43 = ssub.s32 %s14, %s21
      %p44 = scmp.eq.s32.totalorder %s43, 0
      %s46 = sadd.s32 %s45, 1
      %s47 = scalar_select %p44, %s45, %s46
      %p50 = pneg %p44
      %p51 = scmp.eq.s32.totalorder %s14, 2
      %p52 = por %p50, %p51
      %p53 = scmp.ne.s32.totalorder %s45, %s48
      %p54 = scmp.eq.s32.totalorder %s14, 0
      %p55 = por %p53, %p54
      %p56 = scmp.ne.s32.totalorder %s45, %s48
      %p57 = scmp.eq.s32.totalorder %s19, 2
      %p58 = por %p56, %p57
      %p59 = scmp.ne.s32.totalorder %s48, %s49
      %p60 = scmp.eq.s32.totalorder %s19, 0
      %p61 = por %p59, %p60
      %p62 = scmp.ne.s32.totalorder %s48, %s49
      %p63 = scmp.eq.s32.totalorder %s20, 2
      %p64 = por %p62, %p63
      %p66 = scmp.ne.s32.totalorder %s49, %s65
      %p67 = scmp.eq.s32.totalorder %s20, 0
      %p68 = por %p66, %p67
      %s70 = sadd.s32 %s69, 1
      %p73 = scmp.eq.s32.totalorder %s14, 2
      %p74 = scmp.ne.s32.totalorder %s69, %s71
      %p75 = scmp.eq.s32.totalorder %s14, 0
      %p76 = por %p74, %p75
      %p77 = scmp.ne.s32.totalorder %s69, %s71
      %p78 = scmp.eq.s32.totalorder %s19, 2
      %p79 = por %p77, %p78
      %p80 = scmp.ne.s32.totalorder %s71, %s72
      %p81 = scmp.eq.s32.totalorder %s19, 0
      %p82 = por %p80, %p81
      %p83 = scmp.ne.s32.totalorder %s71, %s72
      %p84 = scmp.eq.s32.totalorder %s20, 2
      %p85 = por %p83, %p84
      %p87 = scmp.ne.s32.totalorder %s72, %s86
      %p88 = scmp.eq.s32.totalorder %s20, 0
      %p89 = por %p87, %p88
      %s90 = ssub.s32 %s14, %s21
      %p91 = scmp.eq.s32.totalorder %s90, 0
      %s93 = sadd.s32 %s92, 1
      %s94 = scalar_select %p91, %s92, %s93
      %p97 = pneg %p91
      %p98 = scmp.eq.s32.totalorder %s14, 2
      %p99 = por %p97, %p98
      %p100 = scmp.ne.s32.totalorder %s92, %s95
      %p101 = scmp.eq.s32.totalorder %s14, 0
      %p102 = por %p100, %p101
      %p103 = scmp.ne.s32.totalorder %s92, %s95
      %p104 = scmp.eq.s32.totalorder %s19, 2
      %p105 = por %p103, %p104
      %p106 = scmp.ne.s32.totalorder %s95, %s96
      %p107 = scmp.eq.s32.totalorder %s19, 0
      %p108 = por %p106, %p107
      %p109 = scmp.ne.s32.totalorder %s95, %s96
      %p110 = scmp.eq.s32.totalorder %s20, 2
      %p111 = por %p109, %p110
      %p113 = scmp.ne.s32.totalorder %s96, %s112
      %p114 = scmp.eq.s32.totalorder %s20, 0
      %p115 = por %p113, %p114
      %s116 = ssub.s32 %s14, %s21
      %p117 = scmp.eq.s32.totalorder %s116, 0
      %s119 = sadd.s32 %s118, 1
      %s120 = scalar_select %p117, %s118, %s119
      %p123 = pneg %p117
      %p124 = scmp.eq.s32.totalorder %s14, 2
      %p125 = por %p123, %p124
      %p126 = scmp.ne.s32.totalorder %s118, %s121
      %p127 = scmp.eq.s32.totalorder %s14, 0
      %p128 = por %p126, %p127
      %p129 = scmp.ne.s32.totalorder %s118, %s121
      %p130 = scmp.eq.s32.totalorder %s19, 2
      %p131 = por %p129, %p130
      %p132 = scmp.ne.s32.totalorder %s121, %s122
      %p133 = scmp.eq.s32.totalorder %s19, 0
      %p134 = por %p132, %p133
      %p135 = scmp.ne.s32.totalorder %s121, %s122
      %p136 = scmp.eq.s32.totalorder %s20, 2
      %p137 = por %p135, %p136
      %p139 = scmp.ne.s32.totalorder %s122, %s138
      %p140 = scmp.eq.s32.totalorder %s20, 0
      %p141 = por %p139, %p140
      %p142 = scmp.le.s32.totalorder 1, %s14
      %p143 = scmp.lt.s32.totalorder %s14, 4
      %p144 = pnand %p142, %p143
      %p145 = pneg %p144
      // Predicated region
      $region9: #{tpu_custom_call.1} parent=5 // pred_check
        _
      $region10: #{tpu_custom_call.1} parent=5 // pred_check_branch
        %147 = sbr.rel (%p144) target = $region12
      $region11: #{tpu_custom_call.1} parent=5 // pred_region
        %s148 = ssub.s32 %s14, 1
        // Predicated region
        $region13: #{tpu_custom_call.1} parent=11 // pred_check
          %p149 = pneg %p35
        $region14: #{tpu_custom_call.1} parent=11 // pred_check_branch
          %151 = sbr.rel (%p149) target = $region16
        $region15: #{tpu_custom_call.1} parent=11 // pred_region
          %s153 = ssub.s32 16, 16
          %154 = vsyncadd [#allocation5], %s153
          %s156 = sshll.u32 %s0, 4
          %s157 = int_to_ptr.vmem [resolvable:$true] %s156
          %159 = dma.vmem_to_smem %s157, 16, [#allocation3], [#allocation5]
        $region16: #{tpu_custom_call.1} parent=11 // pred_fallthru
          _
        // Predicated region
        $region17: #{tpu_custom_call.1} parent=11 // pred_check
          %p160 = pneg %p82
        $region18: #{tpu_custom_call.1} parent=11 // pred_check_branch
          %162 = sbr.rel (%p160) target = $region20
        $region19: #{tpu_custom_call.1} parent=11 // pred_region
          _
        $region20: #{tpu_custom_call.1} parent=11 // pred_fallthru
          _
      $region12: #{tpu_custom_call.1} parent=5 // pred_fallthru
        _
      %p163 = scmp.lt.s32.totalorder %s14, 3
      // Predicated region
      $region21: #{tpu_custom_call.1} parent=5 // pred_check
        %p164 = pneg %p163
      $region22: #{tpu_custom_call.1} parent=5 // pred_check_branch
        %166 = sbr.rel (%p164) target = $region24
      $region23: #{tpu_custom_call.1} parent=5 // pred_region
        // Predicated region
        $region25: #{tpu_custom_call.1} parent=23 // pred_check
          %p167 = pneg %p55
        $region26: #{tpu_custom_call.1} parent=23 // pred_check_branch
          %169 = sbr.rel (%p167) target = $region28
        $region27: #{tpu_custom_call.1} parent=23 // pred_region
          %s170 = smul.u32 128, %s14
          %s171 = ssub.s32 325, %s170
          %p172 = scmp.lt.s32.totalorder %s171, 128
          %s173 = scalar_select %p172, %s171, 128
          %s174 = smul.u32 128, %s173
          %p175 = scmp.lt.s32.totalorder %s170, 324
          %s176 = scalar_select %p175, %s170, 324
          %s177 = smul.addr %s176, 8
          %s178 = scalar_lea.vmem %s1, %s177
          %s179 = smul.u32 128, %s14
          %s180 = ssub.s32 325, %s179
          %p181 = scmp.lt.s32.totalorder %s180, 128
          %s182 = scalar_select %p181, %s180, 128
          %s183 = smul.u32 128, %s182
        $region28: #{tpu_custom_call.1} parent=23 // pred_fallthru
          _
        // Predicated region
        $region29: #{tpu_custom_call.1} parent=23 // pred_check
          %p184 = pneg %p102
        $region30: #{tpu_custom_call.1} parent=23 // pred_check_branch
          %186 = sbr.rel (%p184) target = $region32
        $region31: #{tpu_custom_call.1} parent=23 // pred_region
          %p187 = scmp.lt.s32.totalorder %s14, 2
          %s188 = scalar_select %p187, %s14, 2
          %s189 = smul.addr %s188, 8
          %s190 = scalar_lea.vmem %s3, %s189
        $region32: #{tpu_custom_call.1} parent=23 // pred_fallthru
          _
      $region24: #{tpu_custom_call.1} parent=5 // pred_fallthru
        _
      %p191 = scmp.le.s32.totalorder 1, %s14
      %p192 = scmp.lt.s32.totalorder %s14, 4
      %p193 = pnand %p191, %p192
      %p194 = pneg %p193
      // Predicated region
      $region33: #{tpu_custom_call.1} parent=5 // pred_check
        _
      $region34: #{tpu_custom_call.1} parent=5 // pred_check_branch
        %196 = sbr.rel (%p193) target = $region36
      $region35: #{tpu_custom_call.1} parent=5 // pred_region
        %s197 = ssub.s32 %s14, 1
        // Predicated region
        $region37: #{tpu_custom_call.1} parent=35 // pred_check
          %p198 = pneg %p35
        $region38: #{tpu_custom_call.1} parent=35 // pred_check_branch
          %200 = sbr.rel (%p198) target = $region40
        $region39: #{tpu_custom_call.1} parent=35 // pred_region
          %201 = dma.done [#allocation5], 16
        $region40: #{tpu_custom_call.1} parent=35 // pred_fallthru
          _
        %202 = sfence
        %p203 = pneg %p35
        %p204 = pneg %p32
        %s205 = smul.u32 128, %s19
        %s206 = ssub.s32 325, %s205
        %p207 = scmp.lt.s32.totalorder %s206, 128
        %s208 = scalar_select %p207, %s206, 128
        %s209 = smul.u32 128, %s208
        %p210 = scmp.lt.s32.totalorder %s205, 324
        %s211 = scalar_select %p210, %s205, 324
        %s212 = smul.addr %s211, 8
        %s213 = scalar_lea.vmem %s1, %s212
        %p214 = pneg %p61
        %p215 = pneg %p58
        %p216 = pneg %p82
        %p217 = pneg %p79
        %p218 = scmp.lt.s32.totalorder %s19, 2
        %s219 = scalar_select %p218, %s19, 2
        %s220 = smul.addr %s219, 8
        %s221 = scalar_lea.vmem %s3, %s220
        %p222 = pneg %p108
        %p223 = pneg %p105
        %p224 = pneg %p134
        %p225 = pneg %p131
        %s226 = sand.u32 %s121, 1
        %s227 = scalar_lea.sflag [#allocation4], %s226
        %s228 = sand.u32 %s121, 1
        %s229 = smul.addr %s228, 8
        %s230 = scalar_lea.vmem [#allocation6], %s229
        %s231 = smul.u32 128, %s19
        %s232 = ssub.s32 325, %s231
        %p233 = scmp.lt.s32.totalorder %s232, 128
        %s234 = scalar_select %p233, %s232, 128
        %s235 = smul.u32 128, %s234
        %p236 = scmp.lt.s32.totalorder %s231, 324
        %s237 = scalar_select %p236, %s231, 324
        %s238 = smul.addr %s237, 8
        %s239 = scalar_lea.vmem %s1, %s238
        %s240 = smul.u32 128, %s19
        %s241 = ssub.s32 325, %s240
        %p242 = scmp.lt.s32.totalorder %s241, 128
        %s243 = scalar_select %p242, %s241, 128
        %s244 = smul.u32 128, %s243
        %p245 = scmp.lt.s32.totalorder %s19, 2
        %s246 = scalar_select %p245, %s19, 2
        %s247 = smul.addr %s246, 8
        %s248 = scalar_lea.vmem %s3, %s247
        %s249 = sld [smem:[#allocation3]]
        %s250 = sld [smem:[#allocation3 + $0x1]]
        %v251 = vld [vmem:[%s2] sm:$0x1]
        %v252 = vld [vmem:[%s239] sm:$0xff]
        %v253 = vld [vmem:[%s239 + $0x8] sm:$0xff]
        %v254 = vld [vmem:[%s239 + $0x10] sm:$0xff]
        %v255 = vld [vmem:[%s239 + $0x18] sm:$0xff]
        %v256 = vld [vmem:[%s239 + $0x20] sm:$0xff]
        %v257 = vld [vmem:[%s239 + $0x28] sm:$0xff]
        %v258 = vld [vmem:[%s239 + $0x30] sm:$0xff]
        %v259 = vld [vmem:[%s239 + $0x38] sm:$0xff]
        %v260 = vld [vmem:[%s239 + $0x40] sm:$0xff]
        %v261 = vld [vmem:[%s239 + $0x48] sm:$0xff]
        %v262 = vld [vmem:[%s239 + $0x50] sm:$0xff]
        %v263 = vld [vmem:[%s239 + $0x58] sm:$0xff]
        %v264 = vld [vmem:[%s239 + $0x60] sm:$0xff]
        %v265 = vld [vmem:[%s239 + $0x68] sm:$0xff]
        %v266 = vld [vmem:[%s239 + $0x70] sm:$0xff]
        %v267 = vld [vmem:[%s239 + $0x78] sm:$0xff]
        %v268 = vld [vmem:[%s239 + $0x80] sm:$0xff]
        %v269 = vld [vmem:[%s239 + $0x88] sm:$0xff]
        %v270 = vld [vmem:[%s239 + $0x90] sm:$0xff]
        %v271 = vld [vmem:[%s239 + $0x98] sm:$0xff]
        %v272 = vld [vmem:[%s239 + $0xa0] sm:$0xff]
        %v273 = vld [vmem:[%s239 + $0xa8] sm:$0xff]
        %v274 = vld [vmem:[%s239 + $0xb0] sm:$0xff]
        %v275 = vld [vmem:[%s239 + $0xb8] sm:$0xff]
        %v276 = vld [vmem:[%s239 + $0xc0] sm:$0xff]
        %v277 = vld [vmem:[%s239 + $0xc8] sm:$0xff]
        %v278 = vld [vmem:[%s239 + $0xd0] sm:$0xff]
        %v279 = vld [vmem:[%s239 + $0xd8] sm:$0xff]
        %v280 = vld [vmem:[%s239 + $0xe0] sm:$0xff]
        %v281 = vld [vmem:[%s239 + $0xe8] sm:$0xff]
        %v282 = vld [vmem:[%s239 + $0xf0] sm:$0xff]
        %v283 = vld [vmem:[%s239 + $0xf8] sm:$0xff]
        %v284 = vld [vmem:[%s239 + $0x100] sm:$0xff]
        %v285 = vld [vmem:[%s239 + $0x108] sm:$0xff]
        %v286 = vld [vmem:[%s239 + $0x110] sm:$0xff]
        %v287 = vld [vmem:[%s239 + $0x118] sm:$0xff]
        %v288 = vld [vmem:[%s239 + $0x120] sm:$0xff]
        %v289 = vld [vmem:[%s239 + $0x128] sm:$0xff]
        %v290 = vld [vmem:[%s239 + $0x130] sm:$0xff]
        %v291 = vld [vmem:[%s239 + $0x138] sm:$0xff]
        %v292 = vld [vmem:[%s239 + $0x140] sm:$0xff]
        %v293 = vld [vmem:[%s239 + $0x148] sm:$0xff]
        %v294 = vld [vmem:[%s239 + $0x150] sm:$0xff]
        %v295 = vld [vmem:[%s239 + $0x158] sm:$0xff]
        %v296 = vld [vmem:[%s239 + $0x160] sm:$0xff]
        %v297 = vld [vmem:[%s239 + $0x168] sm:$0xff]
        %v298 = vld [vmem:[%s239 + $0x170] sm:$0xff]
        %v299 = vld [vmem:[%s239 + $0x178] sm:$0xff]
        %v300 = vld [vmem:[%s239 + $0x180] sm:$0xff]
        %v301 = vld [vmem:[%s239 + $0x188] sm:$0xff]
        %v302 = vld [vmem:[%s239 + $0x190] sm:$0xff]
        %v303 = vld [vmem:[%s239 + $0x198] sm:$0xff]
        %v304 = vld [vmem:[%s239 + $0x1a0] sm:$0xff]
        %v305 = vld [vmem:[%s239 + $0x1a8] sm:$0xff]
        %v306 = vld [vmem:[%s239 + $0x1b0] sm:$0xff]
        %v307 = vld [vmem:[%s239 + $0x1b8] sm:$0xff]
        %v308 = vld [vmem:[%s239 + $0x1c0] sm:$0xff]
        %v309 = vld [vmem:[%s239 + $0x1c8] sm:$0xff]
        %v310 = vld [vmem:[%s239 + $0x1d0] sm:$0xff]
        %v311 = vld [vmem:[%s239 + $0x1d8] sm:$0xff]
        %v312 = vld [vmem:[%s239 + $0x1e0] sm:$0xff]
        %v313 = vld [vmem:[%s239 + $0x1e8] sm:$0xff]
        %v314 = vld [vmem:[%s239 + $0x1f0] sm:$0xff]
        %v315 = vld [vmem:[%s239 + $0x1f8] sm:$0xff]
        %v316 = vld [vmem:[%s239 + $0x200] sm:$0xff]
        %v317 = vld [vmem:[%s239 + $0x208] sm:$0xff]
        %v318 = vld [vmem:[%s239 + $0x210] sm:$0xff]
        %v319 = vld [vmem:[%s239 + $0x218] sm:$0xff]
        %v320 = vld [vmem:[%s239 + $0x220] sm:$0xff]
        %v321 = vld [vmem:[%s239 + $0x228] sm:$0xff]
        %v322 = vld [vmem:[%s239 + $0x230] sm:$0xff]
        %v323 = vld [vmem:[%s239 + $0x238] sm:$0xff]
        %v324 = vld [vmem:[%s239 + $0x240] sm:$0xff]
        %v325 = vld [vmem:[%s239 + $0x248] sm:$0xff]
        %v326 = vld [vmem:[%s239 + $0x250] sm:$0xff]
        %v327 = vld [vmem:[%s239 + $0x258] sm:$0xff]
        %v328 = vld [vmem:[%s239 + $0x260] sm:$0xff]
        %v329 = vld [vmem:[%s239 + $0x268] sm:$0xff]
        %v330 = vld [vmem:[%s239 + $0x270] sm:$0xff]
        %v331 = vld [vmem:[%s239 + $0x278] sm:$0xff]
        %v332 = vld [vmem:[%s239 + $0x280] sm:$0xff]
        %v333 = vld [vmem:[%s239 + $0x288] sm:$0xff]
        %v334 = vld [vmem:[%s239 + $0x290] sm:$0xff]
        %v335 = vld [vmem:[%s239 + $0x298] sm:$0xff]
        %v336 = vld [vmem:[%s239 + $0x2a0] sm:$0xff]
        %v337 = vld [vmem:[%s239 + $0x2a8] sm:$0xff]
        %v338 = vld [vmem:[%s239 + $0x2b0] sm:$0xff]
        %v339 = vld [vmem:[%s239 + $0x2b8] sm:$0xff]
        %v340 = vld [vmem:[%s239 + $0x2c0] sm:$0xff]
        %v341 = vld [vmem:[%s239 + $0x2c8] sm:$0xff]
        %v342 = vld [vmem:[%s239 + $0x2d0] sm:$0xff]
        %v343 = vld [vmem:[%s239 + $0x2d8] sm:$0xff]
        %v344 = vld [vmem:[%s239 + $0x2e0] sm:$0xff]
        %v345 = vld [vmem:[%s239 + $0x2e8] sm:$0xff]
        %v346 = vld [vmem:[%s239 + $0x2f0] sm:$0xff]
        %v347 = vld [vmem:[%s239 + $0x2f8] sm:$0xff]
        %v348 = vld [vmem:[%s239 + $0x300] sm:$0xff]
        %v349 = vld [vmem:[%s239 + $0x308] sm:$0xff]
        %v350 = vld [vmem:[%s239 + $0x310] sm:$0xff]
        %v351 = vld [vmem:[%s239 + $0x318] sm:$0xff]
        %v352 = vld [vmem:[%s239 + $0x320] sm:$0xff]
        %v353 = vld [vmem:[%s239 + $0x328] sm:$0xff]
        %v354 = vld [vmem:[%s239 + $0x330] sm:$0xff]
        %v355 = vld [vmem:[%s239 + $0x338] sm:$0xff]
        %v356 = vld [vmem:[%s239 + $0x340] sm:$0xff]
        %v357 = vld [vmem:[%s239 + $0x348] sm:$0xff]
        %v358 = vld [vmem:[%s239 + $0x350] sm:$0xff]
        %v359 = vld [vmem:[%s239 + $0x358] sm:$0xff]
        %v360 = vld [vmem:[%s239 + $0x360] sm:$0xff]
        %v361 = vld [vmem:[%s239 + $0x368] sm:$0xff]
        %v362 = vld [vmem:[%s239 + $0x370] sm:$0xff]
        %v363 = vld [vmem:[%s239 + $0x378] sm:$0xff]
        %v364 = vld [vmem:[%s239 + $0x380] sm:$0xff]
        %v365 = vld [vmem:[%s239 + $0x388] sm:$0xff]
        %v366 = vld [vmem:[%s239 + $0x390] sm:$0xff]
        %v367 = vld [vmem:[%s239 + $0x398] sm:$0xff]
        %v368 = vld [vmem:[%s239 + $0x3a0] sm:$0xff]
        %v369 = vld [vmem:[%s239 + $0x3a8] sm:$0xff]
        %v370 = vld [vmem:[%s239 + $0x3b0] sm:$0xff]
        %v371 = vld [vmem:[%s239 + $0x3b8] sm:$0xff]
        %v372 = vld [vmem:[%s239 + $0x3c0] sm:$0xff]
        %v373 = vld [vmem:[%s239 + $0x3c8] sm:$0xff]
        %v374 = vld [vmem:[%s239 + $0x3d0] sm:$0xff]
        %v375 = vld [vmem:[%s239 + $0x3d8] sm:$0xff]
        %v376 = vld [vmem:[%s239 + $0x3e0] sm:$0xff]
        %v377 = vld [vmem:[%s239 + $0x3e8] sm:$0xff]
        %v378 = vld [vmem:[%s239 + $0x3f0] sm:$0xff]
        %v379 = vld [vmem:[%s239 + $0x3f8] sm:$0xff]
        %v380 = vstv %s249
        %vm381 = vcmask 261120
        %v383 = vsel %vm381, %v251, 0
        %v386 = vsel %vm381, %v252, 0
        %v389 = vsel %vm381, %v253, 0
        %v392 = vsel %vm381, %v254, 0
        %v395 = vsel %vm381, %v255, 0
        %v398 = vsel %vm381, %v256, 0
        %v401 = vsel %vm381, %v257, 0
        %v404 = vsel %vm381, %v258, 0
        %v407 = vsel %vm381, %v259, 0
        %v410 = vsel %vm381, %v260, 0
        %v413 = vsel %vm381, %v261, 0
        %v416 = vsel %vm381, %v262, 0
        %v419 = vsel %vm381, %v263, 0
        %v422 = vsel %vm381, %v264, 0
        %v425 = vsel %vm381, %v265, 0
        %v428 = vsel %vm381, %v266, 0
        %v431 = vsel %vm381, %v267, 0
        %v434 = vsel %vm381, %v268, 0
        %v437 = vsel %vm381, %v269, 0
        %v440 = vsel %vm381, %v270, 0
        %v443 = vsel %vm381, %v271, 0
        %v446 = vsel %vm381, %v272, 0
        %v449 = vsel %vm381, %v273, 0
        %v452 = vsel %vm381, %v274, 0
        %v455 = vsel %vm381, %v275, 0
        %v458 = vsel %vm381, %v276, 0
        %v461 = vsel %vm381, %v277, 0
        %v464 = vsel %vm381, %v278, 0
        %v467 = vsel %vm381, %v279, 0
        %v470 = vsel %vm381, %v280, 0
        %v473 = vsel %vm381, %v281, 0
        %v476 = vsel %vm381, %v282, 0
        %v479 = vsel %vm381, %v283, 0
        %v482 = vsel %vm381, %v284, 0
        %v485 = vsel %vm381, %v285, 0
        %v488 = vsel %vm381, %v286, 0
        %v491 = vsel %vm381, %v287, 0
        %v494 = vsel %vm381, %v288, 0
        %v497 = vsel %vm381, %v289, 0
        %v500 = vsel %vm381, %v290, 0
        %v503 = vsel %vm381, %v291, 0
        %v506 = vsel %vm381, %v292, 0
        %v509 = vsel %vm381, %v293, 0
        %v512 = vsel %vm381, %v294, 0
        %v515 = vsel %vm381, %v295, 0
        %v518 = vsel %vm381, %v296, 0
        %v521 = vsel %vm381, %v297, 0
        %v524 = vsel %vm381, %v298, 0
        %v527 = vsel %vm381, %v299, 0
        %v530 = vsel %vm381, %v300, 0
        %v533 = vsel %vm381, %v301, 0
        %v536 = vsel %vm381, %v302, 0
        %v539 = vsel %vm381, %v303, 0
        %v542 = vsel %vm381, %v304, 0
        %v545 = vsel %vm381, %v305, 0
        %v548 = vsel %vm381, %v306, 0
        %v551 = vsel %vm381, %v307, 0
        %v554 = vsel %vm381, %v308, 0
        %v557 = vsel %vm381, %v309, 0
        %v560 = vsel %vm381, %v310, 0
        %v563 = vsel %vm381, %v311, 0
        %v566 = vsel %vm381, %v312, 0
        %v569 = vsel %vm381, %v313, 0
        %v572 = vsel %vm381, %v314, 0
        %v575 = vsel %vm381, %v315, 0
        %v578 = vsel %vm381, %v316, 0
        %v581 = vsel %vm381, %v317, 0
        %v584 = vsel %vm381, %v318, 0
        %v587 = vsel %vm381, %v319, 0
        %v590 = vsel %vm381, %v320, 0
        %v593 = vsel %vm381, %v321, 0
        %v596 = vsel %vm381, %v322, 0
        %v599 = vsel %vm381, %v323, 0
        %v602 = vsel %vm381, %v324, 0
        %v605 = vsel %vm381, %v325, 0
        %v608 = vsel %vm381, %v326, 0
        %v611 = vsel %vm381, %v327, 0
        %v614 = vsel %vm381, %v328, 0
        %v617 = vsel %vm381, %v329, 0
        %v620 = vsel %vm381, %v330, 0
        %v623 = vsel %vm381, %v331, 0
        %v626 = vsel %vm381, %v332, 0
        %v629 = vsel %vm381, %v333, 0
        %v632 = vsel %vm381, %v334, 0
        %v635 = vsel %vm381, %v335, 0
        %v638 = vsel %vm381, %v336, 0
        %v641 = vsel %vm381, %v337, 0
        %v644 = vsel %vm381, %v338, 0
        %v647 = vsel %vm381, %v339, 0
        %v650 = vsel %vm381, %v340, 0
        %v653 = vsel %vm381, %v341, 0
        %v656 = vsel %vm381, %v342, 0
        %v659 = vsel %vm381, %v343, 0
        %v662 = vsel %vm381, %v344, 0
        %v665 = vsel %vm381, %v345, 0
        %v668 = vsel %vm381, %v346, 0
        %v671 = vsel %vm381, %v347, 0
        %v674 = vsel %vm381, %v348, 0
        %v677 = vsel %vm381, %v349, 0
        %v680 = vsel %vm381, %v350, 0
        %v683 = vsel %vm381, %v351, 0
        %v686 = vsel %vm381, %v352, 0
        %v689 = vsel %vm381, %v353, 0
        %v692 = vsel %vm381, %v354, 0
        %v695 = vsel %vm381, %v355, 0
        %v698 = vsel %vm381, %v356, 0
        %v701 = vsel %vm381, %v357, 0
        %v704 = vsel %vm381, %v358, 0
        %v707 = vsel %vm381, %v359, 0
        %v710 = vsel %vm381, %v360, 0
        %v713 = vsel %vm381, %v361, 0
        %v716 = vsel %vm381, %v362, 0
        %v719 = vsel %vm381, %v363, 0
        %v722 = vsel %vm381, %v364, 0
        %v725 = vsel %vm381, %v365, 0
        %v728 = vsel %vm381, %v366, 0
        %v731 = vsel %vm381, %v367, 0
        %v734 = vsel %vm381, %v368, 0
        %v737 = vsel %vm381, %v369, 0
        %v740 = vsel %vm381, %v370, 0
        %v743 = vsel %vm381, %v371, 0
        %v746 = vsel %vm381, %v372, 0
        %v749 = vsel %vm381, %v373, 0
        %v752 = vsel %vm381, %v374, 0
        %v755 = vsel %vm381, %v375, 0
        %v758 = vsel %vm381, %v376, 0
        %v761 = vsel %vm381, %v377, 0
        %v764 = vsel %vm381, %v378, 0
        %v767 = vsel %vm381, %v379, 0
        %769 = vmatprep.subr.mxu0 0.0
        %770 = vmatpush1.xpose.msra.mxu0 %v431
        %771 = vmatprep.subr.mxu0 0.0
        %772 = vmatpush1.xpose.msra.mxu0 %v428
        %773 = vmatprep.subr.mxu0 0.0
        %774 = vmatpush1.xpose.msra.mxu0 %v425
        %775 = vmatprep.subr.mxu0 0.0
        %776 = vmatpush1.xpose.msra.mxu0 %v422
        %777 = vmatprep.subr.mxu0 0.0
        %778 = vmatpush1.xpose.msra.mxu0 %v419
        %779 = vmatprep.subr.mxu0 0.0
        %780 = vmatpush1.xpose.msra.mxu0 %v416
        %781 = vmatprep.subr.mxu0 0.0
        %782 = vmatpush1.xpose.msra.mxu0 %v413
        %783 = vmatprep.subr.mxu0 0.0
        %784 = vmatpush1.xpose.msra.mxu0 %v410
        %785 = vmatprep.subr.mxu0 0.0
        %786 = vmatpush1.xpose.msra.mxu0 %v407
        %787 = vmatprep.subr.mxu0 0.0
        %788 = vmatpush1.xpose.msra.mxu0 %v404
        %789 = vmatprep.subr.mxu0 0.0
        %790 = vmatpush1.xpose.msra.mxu0 %v401
        %791 = vmatprep.subr.mxu0 0.0
        %792 = vmatpush1.xpose.msra.mxu0 %v398
        %793 = vmatprep.subr.mxu0 0.0
        %794 = vmatpush1.xpose.msra.mxu0 %v395
        %795 = vmatprep.subr.mxu0 0.0
        %796 = vmatpush1.xpose.msra.mxu0 %v392
        %797 = vmatprep.subr.mxu0 0.0
        %798 = vmatpush1.xpose.msra.mxu0 %v389
        %799 = vmatprep.subr.mxu0 0.0
        %800 = vmatpush1.xpose.msra.mxu0 %v386
        %801 = vmatprep.subr.mxu0 0.0
        %802 = vmatpush2.xpose.msra.mxu0 %v479
        %803 = vmatprep.subr.mxu0 0.0
        %804 = vmatpush2.xpose.msra.mxu0 %v476
        %805 = vmatprep.subr.mxu0 0.0
        %806 = vmatpush2.xpose.msra.mxu0 %v473
        %807 = vmatprep.subr.mxu0 0.0
        %808 = vmatpush2.xpose.msra.mxu0 %v470
        %809 = vmatprep.subr.mxu0 0.0
        %810 = vmatpush2.xpose.msra.mxu0 %v467
        %811 = vmatprep.subr.mxu0 0.0
        %812 = vmatpush2.xpose.msra.mxu0 %v464
        %813 = vmatprep.subr.mxu0 0.0
        %814 = vmatpush2.xpose.msra.mxu0 %v461
        %815 = vmatprep.subr.mxu0 0.0
        %816 = vmatpush2.xpose.msra.mxu0 %v458
        %817 = vmatprep.subr.mxu0 0.0
        %818 = vmatpush2.xpose.msra.mxu0 %v455
        %819 = vmatprep.subr.mxu0 0.0
        %820 = vmatpush2.xpose.msra.mxu0 %v452
        %821 = vmatprep.subr.mxu0 0.0
        %822 = vmatpush2.xpose.msra.mxu0 %v449
        %823 = vmatprep.subr.mxu0 0.0
        %824 = vmatpush2.xpose.msra.mxu0 %v446
        %825 = vmatprep.subr.mxu0 0.0
        %826 = vmatpush2.xpose.msra.mxu0 %v443
        %827 = vmatprep.subr.mxu0 0.0
        %828 = vmatpush2.xpose.msra.mxu0 %v440
        %829 = vmatprep.subr.mxu0 0.0
        %830 = vmatpush2.xpose.msra.mxu0 %v437
        %831 = vmatprep.subr.mxu0 0.0
        %832 = vmatpush2.xpose.msra.mxu0 %v434
        %833 = vmatprep.mubr.f32.mxu0 0.0
        %834 = vmatmul.mubr.f32.gmra.mxu0 %v383
        %v835 = vpop.f32.mrf.mxu0
        %v836 = vadd.f32 %v380, %v835
        %v837 = vpop.f32.mrf.mxu0
        %v838 = vadd.f32 %v380, %v837
        %839 = vdwg.mxu0
        %840 = vmatprep.subr.mxu0 0.0
        %841 = vmatpush1.xpose.msra.mxu0 %v527
        %842 = vmatprep.subr.mxu0 0.0
        %843 = vmatpush1.xpose.msra.mxu0 %v524
        %844 = vmatprep.subr.mxu0 0.0
        %845 = vmatpush1.xpose.msra.mxu0 %v521
        %846 = vmatprep.subr.mxu0 0.0
        %847 = vmatpush1.xpose.msra.mxu0 %v518
        %848 = vmatprep.subr.mxu0 0.0
        %849 = vmatpush1.xpose.msra.mxu0 %v515
        %850 = vmatprep.subr.mxu0 0.0
        %851 = vmatpush1.xpose.msra.mxu0 %v512
        %852 = vmatprep.subr.mxu0 0.0
        %853 = vmatpush1.xpose.msra.mxu0 %v509
        %854 = vmatprep.subr.mxu0 0.0
        %855 = vmatpush1.xpose.msra.mxu0 %v506
        %856 = vmatprep.subr.mxu0 0.0
        %857 = vmatpush1.xpose.msra.mxu0 %v503
        %858 = vmatprep.subr.mxu0 0.0
        %859 = vmatpush1.xpose.msra.mxu0 %v500
        %860 = vmatprep.subr.mxu0 0.0
        %861 = vmatpush1.xpose.msra.mxu0 %v497
        %862 = vmatprep.subr.mxu0 0.0
        %863 = vmatpush1.xpose.msra.mxu0 %v494
        %864 = vmatprep.subr.mxu0 0.0
        %865 = vmatpush1.xpose.msra.mxu0 %v491
        %866 = vmatprep.subr.mxu0 0.0
        %867 = vmatpush1.xpose.msra.mxu0 %v488
        %868 = vmatprep.subr.mxu0 0.0
        %869 = vmatpush1.xpose.msra.mxu0 %v485
        %870 = vmatprep.subr.mxu0 0.0
        %871 = vmatpush1.xpose.msra.mxu0 %v482
        %872 = vmatprep.subr.mxu0 0.0
        %873 = vmatpush2.xpose.msra.mxu0 %v575
        %874 = vmatprep.subr.mxu0 0.0
        %875 = vmatpush2.xpose.msra.mxu0 %v572
        %876 = vmatprep.subr.mxu0 0.0
        %877 = vmatpush2.xpose.msra.mxu0 %v569
        %878 = vmatprep.subr.mxu0 0.0
        %879 = vmatpush2.xpose.msra.mxu0 %v566
        %880 = vmatprep.subr.mxu0 0.0
        %881 = vmatpush2.xpose.msra.mxu0 %v563
        %882 = vmatprep.subr.mxu0 0.0
        %883 = vmatpush2.xpose.msra.mxu0 %v560
        %884 = vmatprep.subr.mxu0 0.0
        %885 = vmatpush2.xpose.msra.mxu0 %v557
        %886 = vmatprep.subr.mxu0 0.0
        %887 = vmatpush2.xpose.msra.mxu0 %v554
        %888 = vmatprep.subr.mxu0 0.0
        %889 = vmatpush2.xpose.msra.mxu0 %v551
        %890 = vmatprep.subr.mxu0 0.0
        %891 = vmatpush2.xpose.msra.mxu0 %v548
        %892 = vmatprep.subr.mxu0 0.0
        %893 = vmatpush2.xpose.msra.mxu0 %v545
        %894 = vmatprep.subr.mxu0 0.0
        %895 = vmatpush2.xpose.msra.mxu0 %v542
        %896 = vmatprep.subr.mxu0 0.0
        %897 = vmatpush2.xpose.msra.mxu0 %v539
        %898 = vmatprep.subr.mxu0 0.0
        %899 = vmatpush2.xpose.msra.mxu0 %v536
        %900 = vmatprep.subr.mxu0 0.0
        %901 = vmatpush2.xpose.msra.mxu0 %v533
        %902 = vmatprep.subr.mxu0 0.0
        %903 = vmatpush2.xpose.msra.mxu0 %v530
        %904 = vmatprep.mubr.f32.mxu0 0.0
        %905 = vmatmul.mubr.f32.gmra.mxu0 %v383
        %v906 = vpop.f32.mrf.mxu0
        %v907 = vadd.f32 %v380, %v906
        %v908 = vpop.f32.mrf.mxu0
        %v909 = vadd.f32 %v380, %v908
        %910 = vdwg.mxu0
        %911 = vmatprep.subr.mxu0 0.0
        %912 = vmatpush1.xpose.msra.mxu0 %v623
        %913 = vmatprep.subr.mxu0 0.0
        %914 = vmatpush1.xpose.msra.mxu0 %v620
        %915 = vmatprep.subr.mxu0 0.0
        %916 = vmatpush1.xpose.msra.mxu0 %v617
        %917 = vmatprep.subr.mxu0 0.0
        %918 = vmatpush1.xpose.msra.mxu0 %v614
        %919 = vmatprep.subr.mxu0 0.0
        %920 = vmatpush1.xpose.msra.mxu0 %v611
        %921 = vmatprep.subr.mxu0 0.0
        %922 = vmatpush1.xpose.msra.mxu0 %v608
        %923 = vmatprep.subr.mxu0 0.0
        %924 = vmatpush1.xpose.msra.mxu0 %v605
        %925 = vmatprep.subr.mxu0 0.0
        %926 = vmatpush1.xpose.msra.mxu0 %v602
        %927 = vmatprep.subr.mxu0 0.0
        %928 = vmatpush1.xpose.msra.mxu0 %v599
        %929 = vmatprep.subr.mxu0 0.0
        %930 = vmatpush1.xpose.msra.mxu0 %v596
        %931 = vmatprep.subr.mxu0 0.0
        %932 = vmatpush1.xpose.msra.mxu0 %v593
        %933 = vmatprep.subr.mxu0 0.0
        %934 = vmatpush1.xpose.msra.mxu0 %v590
        %935 = vmatprep.subr.mxu0 0.0
        %936 = vmatpush1.xpose.msra.mxu0 %v587
        %937 = vmatprep.subr.mxu0 0.0
        %938 = vmatpush1.xpose.msra.mxu0 %v584
        %939 = vmatprep.subr.mxu0 0.0
        %940 = vmatpush1.xpose.msra.mxu0 %v581
        %941 = vmatprep.subr.mxu0 0.0
        %942 = vmatpush1.xpose.msra.mxu0 %v578
        %943 = vmatprep.subr.mxu0 0.0
        %944 = vmatpush2.xpose.msra.mxu0 %v671
        %945 = vmatprep.subr.mxu0 0.0
        %946 = vmatpush2.xpose.msra.mxu0 %v668
        %947 = vmatprep.subr.mxu0 0.0
        %948 = vmatpush2.xpose.msra.mxu0 %v665
        %949 = vmatprep.subr.mxu0 0.0
        %950 = vmatpush2.xpose.msra.mxu0 %v662
        %951 = vmatprep.subr.mxu0 0.0
        %952 = vmatpush2.xpose.msra.mxu0 %v659
        %953 = vmatprep.subr.mxu0 0.0
        %954 = vmatpush2.xpose.msra.mxu0 %v656
        %955 = vmatprep.subr.mxu0 0.0
        %956 = vmatpush2.xpose.msra.mxu0 %v653
        %957 = vmatprep.subr.mxu0 0.0
        %958 = vmatpush2.xpose.msra.mxu0 %v650
        %959 = vmatprep.subr.mxu0 0.0
        %960 = vmatpush2.xpose.msra.mxu0 %v647
        %961 = vmatprep.subr.mxu0 0.0
        %962 = vmatpush2.xpose.msra.mxu0 %v644
        %963 = vmatprep.subr.mxu0 0.0
        %964 = vmatpush2.xpose.msra.mxu0 %v641
        %965 = vmatprep.subr.mxu0 0.0
        %966 = vmatpush2.xpose.msra.mxu0 %v638
        %967 = vmatprep.subr.mxu0 0.0
        %968 = vmatpush2.xpose.msra.mxu0 %v635
        %969 = vmatprep.subr.mxu0 0.0
        %970 = vmatpush2.xpose.msra.mxu0 %v632
        %971 = vmatprep.subr.mxu0 0.0
        %972 = vmatpush2.xpose.msra.mxu0 %v629
        %973 = vmatprep.subr.mxu0 0.0
        %974 = vmatpush2.xpose.msra.mxu0 %v626
        %975 = vmatprep.mubr.f32.mxu0 0.0
        %976 = vmatmul.mubr.f32.gmra.mxu0 %v383
        %v977 = vpop.f32.mrf.mxu0
        %v978 = vadd.f32 %v380, %v977
        %v979 = vpop.f32.mrf.mxu0
        %v980 = vadd.f32 %v380, %v979
        %981 = vdwg.mxu0
        %982 = vmatprep.subr.mxu0 0.0
        %983 = vmatpush1.xpose.msra.mxu0 %v719
        %984 = vmatprep.subr.mxu0 0.0
        %985 = vmatpush1.xpose.msra.mxu0 %v716
        %986 = vmatprep.subr.mxu0 0.0
        %987 = vmatpush1.xpose.msra.mxu0 %v713
        %988 = vmatprep.subr.mxu0 0.0
        %989 = vmatpush1.xpose.msra.mxu0 %v710
        %990 = vmatprep.subr.mxu0 0.0
        %991 = vmatpush1.xpose.msra.mxu0 %v707
        %992 = vmatprep.subr.mxu0 0.0
        %993 = vmatpush1.xpose.msra.mxu0 %v704
        %994 = vmatprep.subr.mxu0 0.0
        %995 = vmatpush1.xpose.msra.mxu0 %v701
        %996 = vmatprep.subr.mxu0 0.0
        %997 = vmatpush1.xpose.msra.mxu0 %v698
        %998 = vmatprep.subr.mxu0 0.0
        %999 = vmatpush1.xpose.msra.mxu0 %v695
        %1000 = vmatprep.subr.mxu0 0.0
        %1001 = vmatpush1.xpose.msra.mxu0 %v692
        %1002 = vmatprep.subr.mxu0 0.0
        %1003 = vmatpush1.xpose.msra.mxu0 %v689
        %1004 = vmatprep.subr.mxu0 0.0
        %1005 = vmatpush1.xpose.msra.mxu0 %v686
        %1006 = vmatprep.subr.mxu0 0.0
        %1007 = vmatpush1.xpose.msra.mxu0 %v683
        %1008 = vmatprep.subr.mxu0 0.0
        %1009 = vmatpush1.xpose.msra.mxu0 %v680
        %1010 = vmatprep.subr.mxu0 0.0
        %1011 = vmatpush1.xpose.msra.mxu0 %v677
        %1012 = vmatprep.subr.mxu0 0.0
        %1013 = vmatpush1.xpose.msra.mxu0 %v674
        %1014 = vmatprep.subr.mxu0 0.0
        %1015 = vmatpush2.xpose.msra.mxu0 %v767
        %1016 = vmatprep.subr.mxu0 0.0
        %1017 = vmatpush2.xpose.msra.mxu0 %v764
        %1018 = vmatprep.subr.mxu0 0.0
        %1019 = vmatpush2.xpose.msra.mxu0 %v761
        %1020 = vmatprep.subr.mxu0 0.0
        %1021 = vmatpush2.xpose.msra.mxu0 %v758
        %1022 = vmatprep.subr.mxu0 0.0
        %1023 = vmatpush2.xpose.msra.mxu0 %v755
        %1024 = vmatprep.subr.mxu0 0.0
        %1025 = vmatpush2.xpose.msra.mxu0 %v752
        %1026 = vmatprep.subr.mxu0 0.0
        %1027 = vmatpush2.xpose.msra.mxu0 %v749
        %1028 = vmatprep.subr.mxu0 0.0
        %1029 = vmatpush2.xpose.msra.mxu0 %v746
        %1030 = vmatprep.subr.mxu0 0.0
        %1031 = vmatpush2.xpose.msra.mxu0 %v743
        %1032 = vmatprep.subr.mxu0 0.0
        %1033 = vmatpush2.xpose.msra.mxu0 %v740
        %1034 = vmatprep.subr.mxu0 0.0
        %1035 = vmatpush2.xpose.msra.mxu0 %v737
        %1036 = vmatprep.subr.mxu0 0.0
        %1037 = vmatpush2.xpose.msra.mxu0 %v734
        %1038 = vmatprep.subr.mxu0 0.0
        %1039 = vmatpush2.xpose.msra.mxu0 %v731
        %1040 = vmatprep.subr.mxu0 0.0
        %1041 = vmatpush2.xpose.msra.mxu0 %v728
        %1042 = vmatprep.subr.mxu0 0.0
        %1043 = vmatpush2.xpose.msra.mxu0 %v725
        %1044 = vmatprep.subr.mxu0 0.0
        %1045 = vmatpush2.xpose.msra.mxu0 %v722
        %1046 = vmatprep.mubr.f32.mxu0 0.0
        %1047 = vmatmul.mubr.f32.gmra.mxu0 %v383
        %v1048 = vpop.f32.mrf.mxu0
        %v1049 = vadd.f32 %v380, %v1048
        %v1050 = vpop.f32.mrf.mxu0
        %v1051 = vadd.f32 %v380, %v1050
        %1052 = vdwg.mxu0
        %1053 = vst [vmem:[#allocation2] sm:$0x1] %v836
        %1054 = vst [vmem:[#allocation2 + $0x1] sm:$0x1] %v838
        %1055 = vst [vmem:[#allocation2 + $0x2] sm:$0x1] %v907
        %1056 = vst [vmem:[#allocation2 + $0x3] sm:$0x1] %v909
        %1057 = vst [vmem:[#allocation2 + $0x4] sm:$0x1] %v978
        %1058 = vst [vmem:[#allocation2 + $0x5] sm:$0x1] %v980
        %1059 = vst [vmem:[#allocation2 + $0x6] sm:$0x1] %v1049
        %1060 = vst [vmem:[#allocation2 + $0x7] sm:$0x1] %v1051
        %v1061 = vld [vmem:[#allocation2] sm:$0xff]
        %v1062 = vld [vmem:[%s248] sm:$0xff]
        %s1063 = ssub.f32 %s250, 1.0
        %v1064 = vstv %s1063
        %v1065 = vmul.f32 %v1064, %v1062
        %v1066 = vadd.f32 %v1065, 1.0
        %v1067 = vand.u32 2147483647, %v1061
        %v1068 = vsub.f32 0.0, %v1067
        %v1069 = vmul.f32 %v1068, 1.442695
        %v1070 = vpow.pop %v1069
        %v1071 = vadd.f32 %v1070, 1.0
        %v1072 = vlog2.pop %v1071
        %v1073 = vmul.f32 %v1072, 0.6931472
        %v1074 = vmul.f32 -0.5, %v1070
        %v1075 = vadd.f32 %v1074, 1.0
        %v1076 = vmul.f32 %v1075, %v1070
        %v1077 = vand.u32 2147483647, %v1070
        %vm1078 = vcmp.lt.f32.partialorder %v1077, 0.0004427343
        %v1079 = vsel %vm1078, %v1076, %v1073
        %v1080 = vsub.f32 0.0, %v1061
        %v1081 = vmax.f32 %v1080, 0.0
        %v1082 = vadd.f32 %v1079, %v1081
        %v1083 = vsub.f32 1.0, %v1062
        %v1084 = vmul.f32 %v1083, %v1061
        %v1085 = vmul.f32 %v1066, %v1082
        %v1086 = vadd.f32 %v1084, %v1085
        %p1087 = scmp.ne.s32.totalorder %s19, 2
        // Predicated region
        $region41: #{tpu_custom_call.1} parent=35 // pred_check
          %p1088 = pneg %p1087
        $region42: #{tpu_custom_call.1} parent=35 // pred_check_branch
          %1090 = sbr.rel (%p1088) target = $region44
        $region43: #{tpu_custom_call.1} parent=35 // pred_region
          %1091 = vst [vmem:[%s230] sm:$0xff] %v1086
        $region44: #{tpu_custom_call.1} parent=35 // pred_fallthru
          _
        %p1092 = scmp.eq.s32.totalorder %s19, 2
        // Predicated region
        $region45: #{tpu_custom_call.1} parent=35 // pred_check
          %p1093 = pneg %p1092
        $region46: #{tpu_custom_call.1} parent=35 // pred_check_branch
          %1095 = sbr.rel (%p1093) target = $region48
        $region47: #{tpu_custom_call.1} parent=35 // pred_region
          %v1096 = vlaneseq
          %v1097 = vshrl.u32 %v1096, 7
          %v1098 = vlaneseq
          %v1099 = vand.u32 %v1098, 127
          %s1100 = smul.u32 %s19, 1024
          %v1101 = vmul.u32 %v1097, 128
          %v1102 = vstv %s1100
          %v1103 = vadd.s32 %v1102, %v1101
          %v1104 = vadd.s32 %v1103, %v1099
          %vm1105 = vcmp.lt.s32.totalorder %v1104, 2600
          %v1106 = vsel %vm1105, %v1086, 0.0
          %1107 = vst [vmem:[%s230] sm:$0xff] %v1106
        $region48: #{tpu_custom_call.1} parent=35 // pred_fallthru
          _
        %s1108 = sand.u32 %s121, 1
        %s1109 = scalar_lea.sflag [#allocation4], %s1108
        %s1110 = sand.u32 %s121, 1
        %s1111 = smul.addr %s1110, 8
        %s1112 = scalar_lea.vmem [#allocation6], %s1111
        // Predicated region
        $region49: #{tpu_custom_call.1} parent=35 // pred_check
          %p1113 = pneg %p131
        $region50: #{tpu_custom_call.1} parent=35 // pred_check_branch
          %1115 = sbr.rel (%p1113) target = $region52
        $region51: #{tpu_custom_call.1} parent=35 // pred_region
          %s1117 = ssub.s32 128, 128
          %1118 = vsyncadd %s1109, %s1117
          %s1119 = smul.addr %s19, 128
          %s1120 = scalar_lea.hbm %s4, %s1119
          %s1122 = sshll.u32 %s1112, 4
          %s1123 = int_to_ptr.vmem [resolvable:$true] %s1122
          %1125 = dma.vmem_to_hbm [thread:$0]  %s1123, 128, %s1120, %s1109
        $region52: #{tpu_custom_call.1} parent=35 // pred_fallthru
          _
      $region36: #{tpu_custom_call.1} parent=5 // pred_fallthru
        _
      %p1126 = scmp.le.s32.totalorder 2, %s14
      // Predicated region
      $region53: #{tpu_custom_call.1} parent=5 // pred_check
        %p1127 = pneg %p1126
      $region54: #{tpu_custom_call.1} parent=5 // pred_check_branch
        %1129 = sbr.rel (%p1127) target = $region56
      $region55: #{tpu_custom_call.1} parent=5 // pred_region
        %s1130 = ssub.s32 %s14, 2
        // Predicated region
        $region57: #{tpu_custom_call.1} parent=55 // pred_check
          %p1131 = pneg %p137
        $region58: #{tpu_custom_call.1} parent=55 // pred_check_branch
          %1133 = sbr.rel (%p1131) target = $region60
        $region59: #{tpu_custom_call.1} parent=55 // pred_region
          %s1134 = sand.u32 %s122, 1
          %s1135 = scalar_lea.sflag [#allocation4], %s1134
          %s1136 = sand.u32 %s122, 1
          %s1137 = smul.addr %s1136, 8
          %s1138 = scalar_lea.vmem [#allocation6], %s1137
          %1139 = dma.done %s1135, 128
        $region60: #{tpu_custom_call.1} parent=55 // pred_fallthru
          _
      $region56: #{tpu_custom_call.1} parent=5 // pred_fallthru
        _
    $region6: #{tpu_custom_call.1} parent=1 // loop_footer
      %s18 = sadd.s32 1, %s14
    $region7: #{tpu_custom_call.1} parent=1 // loop_footer_branch
      %13 = sbr.rel target = $region3
    $region8: #{tpu_custom_call.1} parent=1 // loop_exit
      _
    %1140 = vsyncpa [#allocation4], 1
    %s1141 = scalar_lea.sflag [#allocation4], 1
    %1142 = vsyncpa %s1141, 1
    %1143 = vsyncpa [#allocation5], 1
    %s1144 = scalar_lea.sflag [#allocation5], 1
    %1145 = vsyncpa %s1144, 1

</llo_original>
